<compile_context>
chip_gen: v6e
topology: v6e:2x2x1
jax: 0.10.0
libtpu: 0.0.40
codegen_flags: <defaults>
</compile_context>

<pallas_src>
import jax
import jax.numpy as jnp
from jax.experimental import pallas as pl
from jax.experimental.pallas import tpu as pltpu

# ---- small, module-consistent hyper-parameters -------------------------------
B = 2             # batch
L = 16            # sequence length
E = 32            # emb_size
C = 8             # num_filters (output_channel)
P = 4             # dynamic_pool_length
BOT = 32          # bottleneck_dim
VOCAB = 64        # vocab_size
KS = (2, 4, 8)    # conv kernel heights (conv1, conv2, conv3)
NG = len(KS)      # 3 conv groups
KMAX = max(KS)            # 8
MAXPAD = KMAX - 1         # 7 : pad once to the largest conv padding
LOUT = tuple(L + k - 1 for k in KS)   # (17, 19, 23) valid conv output lengths
LOUT_PAD = 24             # max(LOUT)=23 rounded up to a sublane multiple
EMBP_ROWS = 32            # LOUT_PAD + KMAX - 1 = 31 -> 32 (sublane aligned)


# ---- Pallas kernel: gather + pad + fused convs + pool + bottleneck ----------
def xmlcnn_kernel(ids_ref, emb_ref, wc_ref, bc_ref, wb_ref, bb_ref,
                  out_ref, embp):
    # --- embedding gather as a one-hot MXU matmul, then zero-pad in scratch ---
    ids = ids_ref[...]                                           # (B*L, 1) int32
    cols = jax.lax.broadcasted_iota(jnp.int32, (B * L, VOCAB), 1)
    onehot = (cols == ids).astype(jnp.float32)                   # (B*L, VOCAB)
    gathered = jnp.dot(onehot, emb_ref[...],
                       preferred_element_type=jnp.float32)       # (B*L, E)

    embp[...] = jnp.zeros_like(embp)                             # (B, 32, E)
    for b in range(B):                                           # B is tiny/static
        embp[b, MAXPAD:MAXPAD + L, :] = gathered[b * L:(b + 1) * L, :]

    # --- the 3 convs as ONE unfolded matmul: K = KMAX*E = 256 -----------------
    # windows[b, t, d*E + e] = embp[b, t + d, e]  (built once from ref slices)
    windows = jnp.concatenate(
        [embp[:, d:d + LOUT_PAD, :] for d in range(KMAX)], axis=-1)  # (B,24,256)
    win2d = windows.reshape(B * LOUT_PAD, KMAX * E)                  # (48, 256)
    conv = jnp.dot(win2d, wc_ref[...],
                   preferred_element_type=jnp.float32)               # (48, 24)
    conv = jnp.maximum(conv + bc_ref[...], 0.0)                      # bias+ReLU (f32)
    conv = conv.reshape(B, LOUT_PAD, NG * C)                         # (B, 24, 24)

    # --- adaptive max pool (per-group lout) into one (B, 3*P*C) slab ----------
    parts = []
    for g in range(NG):
        lout = LOUT[g]                      # only the first `lout` rows are valid
        grp = conv[:, :, g * C:(g + 1) * C]                          # (B, 24, C)
        for p in range(P):                  # PyTorch AdaptiveMaxPool1d windows
            s = (p * lout) // P
            e = ((p + 1) * lout + P - 1) // P
            parts.append(jnp.max(grp[:, s:e, :], axis=1))            # (B, C)
    pooled = jnp.concatenate(parts, axis=-1)                         # (B, 96)

    # --- bottleneck Linear + ReLU: single K=96 matmul -------------------------
    acc = jnp.dot(pooled, wb_ref[...], preferred_element_type=jnp.float32)
    acc = jnp.maximum(acc + bb_ref[...], 0.0)
    # Dropout == identity at inference.
    out_ref[...] = acc.astype(out_ref.dtype)


# ---- wrapper ----------------------------------------------------------------
@jax.jit
def xmlcnn_encoder(x_ids, params):
    ids = x_ids.reshape(B * L, 1).astype(jnp.int32)
    args = (ids, params["emb"], params["wconv"], params["bconv"],
            params["wb"], params["bb"])
    vm = pl.BlockSpec(memory_space=pltpu.MemorySpace.VMEM)
    return pl.pallas_call(
        xmlcnn_kernel,
        out_shape=jax.ShapeDtypeStruct((B, BOT), jnp.float32),
        in_specs=[vm] * len(args),
        out_specs=vm,
        scratch_shapes=[pltpu.VMEM((B, EMBP_ROWS, E), jnp.float32)],
    )(*args)


# ---- deterministic parameter init (shapes from XMLCNN_encoder.__init__) ------
def init_params(key):
    keys = jax.random.split(key, 9)

    # nn.Embedding(VOCAB, E, padding_idx=0)
    emb = 0.1 * jax.random.normal(keys[0], (VOCAB, E), jnp.float32)
    emb = emb.at[0].set(0.0)                                # padding_idx row

    # Conv2d weights, logically (k, E, C) per conv (== torch (C,1,k,E) taps
    # transposed).  Pack into one fused weight: zero-pad taps to KMAX at the
    # FRONT (so conv_k output t uses embp rows t..t+7 with shared MAXPAD pad)
    # and stack groups on the output-channel axis.
    wconv = jnp.zeros((KMAX, E, NG * C), jnp.float32)
    bconv = []
    for g, k in enumerate(KS):
        w = 0.05 * jax.random.normal(keys[1 + 2 * g], (k, E, C), jnp.float32)
        b = 0.01 * jax.random.normal(keys[2 + 2 * g], (C,), jnp.float32)
        wconv = wconv.at[KMAX - k:, :, g * C:(g + 1) * C].set(w)
        bconv.append(b)

    params = {
        "emb": emb,
        "wconv": wconv.reshape(KMAX * E, NG * C),           # (256, 24)
        "bconv": jnp.concatenate(bconv).reshape(1, NG * C), # (1, 24)
    }

    # nn.Linear(3*C*P, BOT): torch weight (BOT, 3*C*P), feature order after
    # torch.cat + view is [group g][channel c][pool p].  The in-kernel pooled
    # slab is ordered [group g][pool p][channel c], so permute rows to match
    # and flatten to (96, BOT) for the single bottleneck matmul.
    wb_full = 0.05 * jax.random.normal(keys[7], (BOT, NG * C * P), jnp.float32)
    wb = (wb_full.T.reshape(NG, C, P, BOT)
          .transpose(0, 2, 1, 3).reshape(NG * P * C, BOT))  # (96, 32)
    bb = 0.01 * jax.random.normal(keys[8], (1, BOT), jnp.float32)
    params["wb"] = wb
    params["bb"] = bb
    return params


if __name__ == "__main__":
    key = jax.random.PRNGKey(0)
    pkey, xkey = jax.random.split(key)
    params = init_params(pkey)
    x = jax.random.randint(xkey, (B, L), 0, VOCAB, dtype=jnp.int32)

    out = xmlcnn_encoder(x, params)
    jax.block_until_ready(out)
    assert out.shape == (B, BOT) and out.dtype == jnp.float32
    print("KERNEL_OK")
</pallas_src>

<mosaic_0001>
module attributes {stable_mosaic.version = 11 : i64} {
  func.func @xmlcnn_kernel(%arg0: memref<32x1xi32, #tpu.memory_space<vmem>>, %arg1: memref<64x32xf32, #tpu.memory_space<vmem>>, %arg2: memref<256x24xf32, #tpu.memory_space<vmem>>, %arg3: memref<1x24xf32, #tpu.memory_space<vmem>>, %arg4: memref<96x32xf32, #tpu.memory_space<vmem>>, %arg5: memref<1x32xf32, #tpu.memory_space<vmem>>, %arg6: memref<2x32xf32, #tpu.memory_space<vmem>>, %arg7: memref<2x32x32xf32, #tpu.memory_space<vmem>>) attributes {dimension_semantics = [], scalar_prefetch = 0 : i64, scratch_operands = 1 : i64, tpu.core_type = #tpu.core_type<tc>} {
    %c0 = arith.constant 0 : index
    %c0_0 = arith.constant 0 : index
    %0 = vector.load %arg0[%c0, %c0_0] : memref<32x1xi32, #tpu.memory_space<vmem>>, vector<32x1xi32>
    %1 = tpu.iota {dimensions = array<i32: 1>} : vector<32x64xi32>
    %2 = vector.broadcast %0 : vector<32x1xi32> to vector<32x64xi32>
    %3 = arith.cmpi eq, %1, %2 : vector<32x64xi32>
    %4 = arith.extui %3 : vector<32x64xi1> to vector<32x64xi32>
    %5 = arith.sitofp %4 : vector<32x64xi32> to vector<32x64xf32>
    %c0_1 = arith.constant 0 : index
    %c0_2 = arith.constant 0 : index
    %6 = vector.load %arg1[%c0_1, %c0_2] : memref<64x32xf32, #tpu.memory_space<vmem>>, vector<64x32xf32>
    %cst = arith.constant dense<0.000000e+00> : vector<32x32xf32>
    %7 = tpu.matmul %5, %6, %cst {dimension_numbers = #tpu.dot_dimension_numbers<[1], [0], [0], [1], [0, 0, 1, 1], [], []>} : vector<32x64xf32>, vector<64x32xf32>, vector<32x32xf32> -> vector<32x32xf32>
    %cst_3 = arith.constant 0.000000e+00 : f32
    %8 = vector.broadcast %cst_3 : f32 to vector<2x32x32xf32>
    %c0_4 = arith.constant 0 : index
    %c0_5 = arith.constant 0 : index
    %c0_6 = arith.constant 0 : index
    %9 = vector.load %arg7[%c0_4, %c0_5, %c0_6] : memref<2x32x32xf32, #tpu.memory_space<vmem>>, vector<2x32x32xf32>
    tpu.vector_store %arg7[%c0_4, %c0_5, %c0_6], %8 {strides = array<i32>} : memref<2x32x32xf32, #tpu.memory_space<vmem>>, vector<2x32x32xf32>,
    %10 = vector.extract_strided_slice %7 {offsets = [0, 0], sizes = [16, 32], strides = [1, 1]} : vector<32x32xf32> to vector<16x32xf32>
    %c0_7 = arith.constant 0 : index
    %c7 = arith.constant 7 : index
    %c0_8 = arith.constant 0 : index
    %11 = vector.load %arg7[%c0_7, %c7, %c0_8] : memref<2x32x32xf32, #tpu.memory_space<vmem>>, vector<1x16x32xf32>
    %12 = vector.shape_cast %11 : vector<1x16x32xf32> to vector<16x32xf32>
    %13 = vector.shape_cast %10 : vector<16x32xf32> to vector<1x16x32xf32>
    tpu.vector_store %arg7[%c0_7, %c7, %c0_8], %13 {strides = array<i32>} : memref<2x32x32xf32, #tpu.memory_space<vmem>>, vector<1x16x32xf32>,
    %14 = vector.extract_strided_slice %7 {offsets = [16, 0], sizes = [16, 32], strides = [1, 1]} : vector<32x32xf32> to vector<16x32xf32>
    %c1 = arith.constant 1 : index
    %c7_9 = arith.constant 7 : index
    %c0_10 = arith.constant 0 : index
    %15 = vector.load %arg7[%c1, %c7_9, %c0_10] : memref<2x32x32xf32, #tpu.memory_space<vmem>>, vector<1x16x32xf32>
    %16 = vector.shape_cast %15 : vector<1x16x32xf32> to vector<16x32xf32>
    %17 = vector.shape_cast %14 : vector<16x32xf32> to vector<1x16x32xf32>
    tpu.vector_store %arg7[%c1, %c7_9, %c0_10], %17 {strides = array<i32>} : memref<2x32x32xf32, #tpu.memory_space<vmem>>, vector<1x16x32xf32>,
    %c0_11 = arith.constant 0 : index
    %c0_12 = arith.constant 0 : index
    %c0_13 = arith.constant 0 : index
    %18 = vector.load %arg7[%c0_11, %c0_12, %c0_13] : memref<2x32x32xf32, #tpu.memory_space<vmem>>, vector<2x24x32xf32>
    %c0_14 = arith.constant 0 : index
    %c1_15 = arith.constant 1 : index
    %c0_16 = arith.constant 0 : index
    %19 = vector.load %arg7[%c0_14, %c1_15, %c0_16] : memref<2x32x32xf32, #tpu.memory_space<vmem>>, vector<2x24x32xf32>
    %c0_17 = arith.constant 0 : index
    %c2 = arith.constant 2 : index
    %c0_18 = arith.constant 0 : index
    %20 = vector.load %arg7[%c0_17, %c2, %c0_18] : memref<2x32x32xf32, #tpu.memory_space<vmem>>, vector<2x24x32xf32>
    %c0_19 = arith.constant 0 : index
    %c3 = arith.constant 3 : index
    %c0_20 = arith.constant 0 : index
    %21 = vector.load %arg7[%c0_19, %c3, %c0_20] : memref<2x32x32xf32, #tpu.memory_space<vmem>>, vector<2x24x32xf32>
    %c0_21 = arith.constant 0 : index
    %c4 = arith.constant 4 : index
    %c0_22 = arith.constant 0 : index
    %22 = vector.load %arg7[%c0_21, %c4, %c0_22] : memref<2x32x32xf32, #tpu.memory_space<vmem>>, vector<2x24x32xf32>
    %c0_23 = arith.constant 0 : index
    %c5 = arith.constant 5 : index
    %c0_24 = arith.constant 0 : index
    %23 = vector.load %arg7[%c0_23, %c5, %c0_24] : memref<2x32x32xf32, #tpu.memory_space<vmem>>, vector<2x24x32xf32>
    %c0_25 = arith.constant 0 : index
    %c6 = arith.constant 6 : index
    %c0_26 = arith.constant 0 : index
    %24 = vector.load %arg7[%c0_25, %c6, %c0_26] : memref<2x32x32xf32, #tpu.memory_space<vmem>>, vector<2x24x32xf32>
    %c0_27 = arith.constant 0 : index
    %c7_28 = arith.constant 7 : index
    %c0_29 = arith.constant 0 : index
    %25 = vector.load %arg7[%c0_27, %c7_28, %c0_29] : memref<2x32x32xf32, #tpu.memory_space<vmem>>, vector<2x24x32xf32>
    %26 = tpu.concatenate %18, %19, %20, %21, %22, %23, %24, %25 in 2 : vector<2x24x32xf32>, vector<2x24x32xf32>, vector<2x24x32xf32>, vector<2x24x32xf32>, vector<2x24x32xf32>, vector<2x24x32xf32>, vector<2x24x32xf32>, vector<2x24x32xf32> -> vector<2x24x256xf32>
    %27 = vector.shape_cast %26 : vector<2x24x256xf32> to vector<48x256xf32>
    %c0_30 = arith.constant 0 : index
    %c0_31 = arith.constant 0 : index
    %28 = vector.load %arg2[%c0_30, %c0_31] : memref<256x24xf32, #tpu.memory_space<vmem>>, vector<256x24xf32>
    %cst_32 = arith.constant dense<0.000000e+00> : vector<48x24xf32>
    %29 = tpu.matmul %27, %28, %cst_32 {dimension_numbers = #tpu.dot_dimension_numbers<[1], [0], [0], [1], [0, 0, 1, 1], [], []>} : vector<48x256xf32>, vector<256x24xf32>, vector<48x24xf32> -> vector<48x24xf32>
    %c0_33 = arith.constant 0 : index
    %c0_34 = arith.constant 0 : index
    %30 = vector.load %arg3[%c0_33, %c0_34] : memref<1x24xf32, #tpu.memory_space<vmem>>, vector<1x24xf32>
    %31 = vector.broadcast %30 : vector<1x24xf32> to vector<48x24xf32>
    %32 = arith.addf %29, %31 : vector<48x24xf32>
    %cst_35 = arith.constant 0.000000e+00 : f32
    %33 = vector.broadcast %cst_35 : f32 to vector<48x24xf32>
    %34 = arith.maximumf %32, %33 : vector<48x24xf32>
    %35 = vector.shape_cast %34 : vector<48x24xf32> to vector<2x24x24xf32>
    %36 = vector.extract_strided_slice %35 {offsets = [0, 0, 0], sizes = [2, 24, 8], strides = [1, 1, 1]} : vector<2x24x24xf32> to vector<2x24x8xf32>
    %37 = vector.extract_strided_slice %36 {offsets = [0, 0, 0], sizes = [2, 5, 8], strides = [1, 1, 1]} : vector<2x24x8xf32> to vector<2x5x8xf32>
    %cst_36 = arith.constant dense<0xFF800000> : vector<2x8xf32>
    %38 = vector.multi_reduction <maximumf>, %37, %cst_36 [1] : vector<2x5x8xf32> to vector<2x8xf32>
    %39 = vector.extract_strided_slice %36 {offsets = [0, 4, 0], sizes = [2, 5, 8], strides = [1, 1, 1]} : vector<2x24x8xf32> to vector<2x5x8xf32>
    %cst_37 = arith.constant dense<0xFF800000> : vector<2x8xf32>
    %40 = vector.multi_reduction <maximumf>, %39, %cst_37 [1] : vector<2x5x8xf32> to vector<2x8xf32>
    %41 = vector.extract_strided_slice %36 {offsets = [0, 8, 0], sizes = [2, 5, 8], strides = [1, 1, 1]} : vector<2x24x8xf32> to vector<2x5x8xf32>
    %cst_38 = arith.constant dense<0xFF800000> : vector<2x8xf32>
    %42 = vector.multi_reduction <maximumf>, %41, %cst_38 [1] : vector<2x5x8xf32> to vector<2x8xf32>
    %43 = vector.extract_strided_slice %36 {offsets = [0, 12, 0], sizes = [2, 5, 8], strides = [1, 1, 1]} : vector<2x24x8xf32> to vector<2x5x8xf32>
    %cst_39 = arith.constant dense<0xFF800000> : vector<2x8xf32>
    %44 = vector.multi_reduction <maximumf>, %43, %cst_39 [1] : vector<2x5x8xf32> to vector<2x8xf32>
    %45 = vector.extract_strided_slice %35 {offsets = [0, 0, 8], sizes = [2, 24, 8], strides = [1, 1, 1]} : vector<2x24x24xf32> to vector<2x24x8xf32>
    %46 = vector.extract_strided_slice %45 {offsets = [0, 0, 0], sizes = [2, 5, 8], strides = [1, 1, 1]} : vector<2x24x8xf32> to vector<2x5x8xf32>
    %cst_40 = arith.constant dense<0xFF800000> : vector<2x8xf32>
    %47 = vector.multi_reduction <maximumf>, %46, %cst_40 [1] : vector<2x5x8xf32> to vector<2x8xf32>
    %48 = vector.extract_strided_slice %45 {offsets = [0, 4, 0], sizes = [2, 6, 8], strides = [1, 1, 1]} : vector<2x24x8xf32> to vector<2x6x8xf32>
    %cst_41 = arith.constant dense<0xFF800000> : vector<2x8xf32>
    %49 = vector.multi_reduction <maximumf>, %48, %cst_41 [1] : vector<2x6x8xf32> to vector<2x8xf32>
    %50 = vector.extract_strided_slice %45 {offsets = [0, 9, 0], sizes = [2, 6, 8], strides = [1, 1, 1]} : vector<2x24x8xf32> to vector<2x6x8xf32>
    %cst_42 = arith.constant dense<0xFF800000> : vector<2x8xf32>
    %51 = vector.multi_reduction <maximumf>, %50, %cst_42 [1] : vector<2x6x8xf32> to vector<2x8xf32>
    %52 = vector.extract_strided_slice %45 {offsets = [0, 14, 0], sizes = [2, 5, 8], strides = [1, 1, 1]} : vector<2x24x8xf32> to vector<2x5x8xf32>
    %cst_43 = arith.constant dense<0xFF800000> : vector<2x8xf32>
    %53 = vector.multi_reduction <maximumf>, %52, %cst_43 [1] : vector<2x5x8xf32> to vector<2x8xf32>
    %54 = vector.extract_strided_slice %35 {offsets = [0, 0, 16], sizes = [2, 24, 8], strides = [1, 1, 1]} : vector<2x24x24xf32> to vector<2x24x8xf32>
    %55 = vector.extract_strided_slice %54 {offsets = [0, 0, 0], sizes = [2, 6, 8], strides = [1, 1, 1]} : vector<2x24x8xf32> to vector<2x6x8xf32>
    %cst_44 = arith.constant dense<0xFF800000> : vector<2x8xf32>
    %56 = vector.multi_reduction <maximumf>, %55, %cst_44 [1] : vector<2x6x8xf32> to vector<2x8xf32>
    %57 = vector.extract_strided_slice %54 {offsets = [0, 5, 0], sizes = [2, 7, 8], strides = [1, 1, 1]} : vector<2x24x8xf32> to vector<2x7x8xf32>
    %cst_45 = arith.constant dense<0xFF800000> : vector<2x8xf32>
    %58 = vector.multi_reduction <maximumf>, %57, %cst_45 [1] : vector<2x7x8xf32> to vector<2x8xf32>
    %59 = vector.extract_strided_slice %54 {offsets = [0, 11, 0], sizes = [2, 7, 8], strides = [1, 1, 1]} : vector<2x24x8xf32> to vector<2x7x8xf32>
    %cst_46 = arith.constant dense<0xFF800000> : vector<2x8xf32>
    %60 = vector.multi_reduction <maximumf>, %59, %cst_46 [1] : vector<2x7x8xf32> to vector<2x8xf32>
    %61 = vector.extract_strided_slice %54 {offsets = [0, 17, 0], sizes = [2, 6, 8], strides = [1, 1, 1]} : vector<2x24x8xf32> to vector<2x6x8xf32>
    %cst_47 = arith.constant dense<0xFF800000> : vector<2x8xf32>
    %62 = vector.multi_reduction <maximumf>, %61, %cst_47 [1] : vector<2x6x8xf32> to vector<2x8xf32>
    %63 = tpu.concatenate %38, %40, %42, %44, %47, %49, %51, %53, %56, %58, %60, %62 in 1 : vector<2x8xf32>, vector<2x8xf32>, vector<2x8xf32>, vector<2x8xf32>, vector<2x8xf32>, vector<2x8xf32>, vector<2x8xf32>, vector<2x8xf32>, vector<2x8xf32>, vector<2x8xf32>, vector<2x8xf32>, vector<2x8xf32> -> vector<2x96xf32>
    %c0_48 = arith.constant 0 : index
    %c0_49 = arith.constant 0 : index
    %64 = vector.load %arg4[%c0_48, %c0_49] : memref<96x32xf32, #tpu.memory_space<vmem>>, vector<96x32xf32>
    %cst_50 = arith.constant dense<0.000000e+00> : vector<2x32xf32>
    %65 = tpu.matmul %63, %64, %cst_50 {dimension_numbers = #tpu.dot_dimension_numbers<[1], [0], [0], [1], [0, 0, 1, 1], [], []>} : vector<2x96xf32>, vector<96x32xf32>, vector<2x32xf32> -> vector<2x32xf32>
    %c0_51 = arith.constant 0 : index
    %c0_52 = arith.constant 0 : index
    %66 = vector.load %arg5[%c0_51, %c0_52] : memref<1x32xf32, #tpu.memory_space<vmem>>, vector<1x32xf32>
    %67 = vector.broadcast %66 : vector<1x32xf32> to vector<2x32xf32>
    %68 = arith.addf %65, %67 : vector<2x32xf32>
    %cst_53 = arith.constant 0.000000e+00 : f32
    %69 = vector.broadcast %cst_53 : f32 to vector<2x32xf32>
    %70 = arith.maximumf %68, %69 : vector<2x32xf32>
    %c0_54 = arith.constant 0 : index
    %c0_55 = arith.constant 0 : index
    %71 = vector.load %arg6[%c0_54, %c0_55] : memref<2x32xf32, #tpu.memory_space<vmem>>, vector<2x32xf32>
    tpu.vector_store %arg6[%c0_54, %c0_55], %70 {strides = array<i32>} : memref<2x32xf32, #tpu.memory_space<vmem>>, vector<2x32xf32>,
    return
  }
}

</mosaic_0001>

<llo_original>
// kernel: xmlcnn_encoder.1
$region0: #{xmlcnn_encoder.1}
  #allocation0 [shape = 'u32[]', space=smem, size = 0x4, offset = 0x4, fixed_abs, tag = 'smem constant byte address 0x4 - core index']
  #allocation1 [shape = 'u32[144,128]{1,0:T(1,128)}', space=vmem, size = 0x12000, scoped, tag = 'internal scratch']
  #allocation2 [shape = 'f32[2,32,32]{2,1,0:T(8,128)}', space=vmem, size = 0x8000, scoped, tag = 'scratch operand']
  %s0 = inlined_call_operand.vmem [shape: s32[32,1], index: 0, kind: input, shape index: {}]
  %s1 = inlined_call_operand.vmem [shape: f32[64,32], index: 1, kind: input, shape index: {}]
  %s2 = inlined_call_operand.vmem [shape: f32[256,24], index: 2, kind: input, shape index: {}]
  %s3 = inlined_call_operand.vmem [shape: f32[1,24], index: 3, kind: input, shape index: {}]
  %s4 = inlined_call_operand.vmem [shape: f32[96,32], index: 4, kind: input, shape index: {}]
  %s5 = inlined_call_operand.vmem [shape: f32[1,32], index: 5, kind: input, shape index: {}]
  %s6 = inlined_call_operand.hbm [shape: f32[2,32], index: 6, kind: output, shape index: {}]
  %s7 = sld [smem:[#allocation0]]
  $region34: #{xmlcnn_encoder.1} parent=0
    _
  %s9 = ssub.s32 1, %s7
  %s10 = scalar_select 0, %s9, %s7
  $region1: #{xmlcnn_encoder.1} parent=0
    #allocation3 [shape = 'u8[1024]{0}', space=vmem, size = 0x400, scoped, tag = 'output window, operand 0, single buffered']
    #allocation4 [shape = 's32[1]{0}', space=sflag, size = 0x4, scoped, tag = 'scoped memory for xmlcnn_encoder.1']
    %11 = vsyncpa [#allocation4], 0
    // Predicated region
    $region2: #{xmlcnn_encoder.1} parent=1 // pred_check
      _
    $region3: #{xmlcnn_encoder.1} parent=1 // pred_check_branch
      %13 = sbr.rel (0) target = $region5
    $region4: #{xmlcnn_encoder.1} parent=1 // pred_region
      _
    $region5: #{xmlcnn_encoder.1} parent=1 // pred_fallthru
      _
    // Predicated region
    $region6: #{xmlcnn_encoder.1} parent=1 // pred_check
      _
    $region7: #{xmlcnn_encoder.1} parent=1 // pred_check_branch
      %15 = sbr.rel (0) target = $region9
    $region8: #{xmlcnn_encoder.1} parent=1 // pred_region
      _
    $region9: #{xmlcnn_encoder.1} parent=1 // pred_fallthru
      _
    // Predicated region
    $region10: #{xmlcnn_encoder.1} parent=1 // pred_check
      _
    $region11: #{xmlcnn_encoder.1} parent=1 // pred_check_branch
      %17 = sbr.rel (0) target = $region13
    $region12: #{xmlcnn_encoder.1} parent=1 // pred_region
      _
    $region13: #{xmlcnn_encoder.1} parent=1 // pred_fallthru
      _
    // Predicated region
    $region14: #{xmlcnn_encoder.1} parent=1 // pred_check
      _
    $region15: #{xmlcnn_encoder.1} parent=1 // pred_check_branch
      %19 = sbr.rel (0) target = $region17
    $region16: #{xmlcnn_encoder.1} parent=1 // pred_region
      _
    $region17: #{xmlcnn_encoder.1} parent=1 // pred_fallthru
      _
    // Predicated region
    $region18: #{xmlcnn_encoder.1} parent=1 // pred_check
      _
    $region19: #{xmlcnn_encoder.1} parent=1 // pred_check_branch
      %21 = sbr.rel (0) target = $region21
    $region20: #{xmlcnn_encoder.1} parent=1 // pred_region
      _
    $region21: #{xmlcnn_encoder.1} parent=1 // pred_fallthru
      _
    // Predicated region
    $region22: #{xmlcnn_encoder.1} parent=1 // pred_check
      _
    $region23: #{xmlcnn_encoder.1} parent=1 // pred_check_branch
      %23 = sbr.rel (0) target = $region25
    $region24: #{xmlcnn_encoder.1} parent=1 // pred_region
      _
    $region25: #{xmlcnn_encoder.1} parent=1 // pred_fallthru
      _
    %v24 = vld [vmem:[%s0] sm:$0xff]
    %v25 = vld [vmem:[%s0 + $0x8] sm:$0xff]
    %v26 = vld [vmem:[%s0 + $0x10] sm:$0xff]
    %v27 = vld [vmem:[%s0 + $0x18] sm:$0xff]
    %v28 = vlaneseq
    %v29 = vand.u32 %v28, 127
    %30 = vset.pattern.permute.xlu0 0
    %31 = vperm.xlu0 %30, %v24
    %v32 = vpop.permute.xlu0 %31
    %33 = vset.pattern.permute.xlu0 0
    %34 = vperm.xlu0 %33, %v25
    %v35 = vpop.permute.xlu0 %34
    %36 = vset.pattern.permute.xlu0 0
    %37 = vperm.xlu0 %36, %v26
    %v38 = vpop.permute.xlu0 %37
    %39 = vset.pattern.permute.xlu0 0
    %40 = vperm.xlu0 %39, %v27
    %v41 = vpop.permute.xlu0 %40
    %vm42 = vcmp.eq.s32.totalorder %v29, %v32
    %vm43 = vcmp.eq.s32.totalorder %v29, %v35
    %vm44 = vcmp.eq.s32.totalorder %v29, %v38
    %vm45 = vcmp.eq.s32.totalorder %v29, %v41
    %v46 = vsel %vm42, 1, 0
    %v47 = vsel %vm43, 1, 0
    %v48 = vsel %vm44, 1, 0
    %v49 = vsel %vm45, 1, 0
    %v50 = vcvt.s32.f32 %v46
    %v51 = vcvt.s32.f32 %v47
    %v52 = vcvt.s32.f32 %v48
    %v53 = vcvt.s32.f32 %v49
    %v54 = vld [vmem:[%s1] sm:$0xff]
    %v55 = vld [vmem:[%s1 + $0x8] sm:$0xff]
    %v56 = vld [vmem:[%s1 + $0x10] sm:$0xff]
    %v57 = vld [vmem:[%s1 + $0x18] sm:$0xff]
    %v58 = vld [vmem:[%s1 + $0x20] sm:$0xff]
    %v59 = vld [vmem:[%s1 + $0x28] sm:$0xff]
    %v60 = vld [vmem:[%s1 + $0x30] sm:$0xff]
    %v61 = vld [vmem:[%s1 + $0x38] sm:$0xff]
    %vm62 = vcmask 523264
    %v64 = vsel %vm62, %v50, 0
    %v67 = vsel %vm62, %v51, 0
    %v70 = vsel %vm62, %v52, 0
    %v73 = vsel %vm62, %v53, 0
    %75 = vmatprep.subr.mxu0 0.0
    %76 = vmatpush1.msra.mxu0 0.0
    %77 = vmatprep.subr.mxu0 0.0
    %78 = vmatpush1.msra.mxu0 0.0
    %79 = vmatprep.subr.mxu0 0.0
    %80 = vmatpush1.msra.mxu0 0.0
    %81 = vmatprep.subr.mxu0 0.0
    %82 = vmatpush1.msra.mxu0 0.0
    %83 = vmatprep.subr.mxu0 0.0
    %84 = vmatpush1.msra.mxu0 0.0
    %85 = vmatprep.subr.mxu0 0.0
    %86 = vmatpush1.msra.mxu0 0.0
    %87 = vmatprep.subr.mxu0 0.0
    %88 = vmatpush1.msra.mxu0 0.0
    %89 = vmatprep.subr.mxu0 0.0
    %90 = vmatpush1.msra.mxu0 0.0
    %91 = vmatprep.subr.mxu0 0.0
    %92 = vmatpush1.msra.mxu0 %v61
    %93 = vmatprep.subr.mxu0 0.0
    %94 = vmatpush1.msra.mxu0 %v60
    %95 = vmatprep.subr.mxu0 0.0
    %96 = vmatpush1.msra.mxu0 %v59
    %97 = vmatprep.subr.mxu0 0.0
    %98 = vmatpush1.msra.mxu0 %v58
    %99 = vmatprep.subr.mxu0 0.0
    %100 = vmatpush1.msra.mxu0 %v57
    %101 = vmatprep.subr.mxu0 0.0
    %102 = vmatpush1.msra.mxu0 %v56
    %103 = vmatprep.subr.mxu0 0.0
    %104 = vmatpush1.msra.mxu0 %v55
    %105 = vmatprep.subr.mxu0 0.0
    %106 = vmatpush1.msra.mxu0 %v54
    %107 = vmatprep.subr.mxu0 0.0
    %108 = vmatpush2.msra.mxu0 0.0
    %109 = vmatprep.subr.mxu0 0.0
    %110 = vmatpush2.msra.mxu0 0.0
    %111 = vmatprep.subr.mxu0 0.0
    %112 = vmatpush2.msra.mxu0 0.0
    %113 = vmatprep.subr.mxu0 0.0
    %114 = vmatpush2.msra.mxu0 0.0
    %115 = vmatprep.subr.mxu0 0.0
    %116 = vmatpush2.msra.mxu0 0.0
    %117 = vmatprep.subr.mxu0 0.0
    %118 = vmatpush2.msra.mxu0 0.0
    %119 = vmatprep.subr.mxu0 0.0
    %120 = vmatpush2.msra.mxu0 0.0
    %121 = vmatprep.subr.mxu0 0.0
    %122 = vmatpush2.msra.mxu0 0.0
    %123 = vmatprep.subr.mxu0 0.0
    %124 = vmatpush2.msra.mxu0 0.0
    %125 = vmatprep.subr.mxu0 0.0
    %126 = vmatpush2.msra.mxu0 0.0
    %127 = vmatprep.subr.mxu0 0.0
    %128 = vmatpush2.msra.mxu0 0.0
    %129 = vmatprep.subr.mxu0 0.0
    %130 = vmatpush2.msra.mxu0 0.0
    %131 = vmatprep.subr.mxu0 0.0
    %132 = vmatpush2.msra.mxu0 0.0
    %133 = vmatprep.subr.mxu0 0.0
    %134 = vmatpush2.msra.mxu0 0.0
    %135 = vmatprep.subr.mxu0 0.0
    %136 = vmatpush2.msra.mxu0 0.0
    %137 = vmatprep.subr.mxu0 0.0
    %138 = vmatpush2.msra.mxu0 0.0
    %139 = vmatprep.mubr.f32.mxu0 0.0
    %140 = vmatmul.mubr.f32.gmra.mxu0 %v64
    %v141 = vpop.f32.mrf.mxu0
    %v142 = vadd.f32 0.0, %v141
    %v143 = vpop.f32.mrf.mxu0
    %144 = vmatprep.mubr.f32.mxu0 0.0
    %145 = vmatmul.mubr.f32.gmra.mxu0 %v67
    %v146 = vpop.f32.mrf.mxu0
    %v147 = vadd.f32 0.0, %v146
    %v148 = vpop.f32.mrf.mxu0
    %149 = vmatprep.mubr.f32.mxu0 0.0
    %150 = vmatmul.mubr.f32.gmra.mxu0 %v70
    %v151 = vpop.f32.mrf.mxu0
    %v152 = vadd.f32 0.0, %v151
    %v153 = vpop.f32.mrf.mxu0
    %154 = vmatprep.mubr.f32.mxu0 0.0
    %155 = vmatmul.mubr.f32.gmra.mxu0 %v73
    %v156 = vpop.f32.mrf.mxu0
    %v157 = vadd.f32 0.0, %v156
    %v158 = vpop.f32.mrf.mxu0
    %159 = vdwg.mxu0
    %vm160 = vcmask 261120
    %161 = vst.msk [vmem:[#allocation2] sm:$0xff] %vm160, 0.0
    %162 = vst.msk [vmem:[#allocation2 + $0x8] sm:$0xff] %vm160, 0.0
    %163 = vst.msk [vmem:[#allocation2 + $0x10] sm:$0xff] %vm160, 0.0
    %164 = vst.msk [vmem:[#allocation2 + $0x18] sm:$0xff] %vm160, 0.0
    %165 = vst.msk [vmem:[#allocation2 + $0x20] sm:$0xff] %vm160, 0.0
    %166 = vst.msk [vmem:[#allocation2 + $0x28] sm:$0xff] %vm160, 0.0
    %167 = vst.msk [vmem:[#allocation2 + $0x30] sm:$0xff] %vm160, 0.0
    %168 = vst.msk [vmem:[#allocation2 + $0x38] sm:$0xff] %vm160, 0.0
    %169 = vst.msk [vmem:[#allocation2 + $0x7] sm:$0xff] %vm160, %v142
    %170 = vst.msk [vmem:[#allocation2 + $0xf] sm:$0xff] %vm160, %v147
    %s171 = scalar_lea.vmem [#allocation2], 32
    %172 = vst.msk [vmem:[%s171 + $0x7] sm:$0xff] %vm160, %v152
    %173 = vst.msk [vmem:[%s171 + $0xf] sm:$0xff] %vm160, %v157
    %v174 = vld [vmem:[#allocation2] sm:$0xff]
    %v175 = vld [vmem:[#allocation2 + $0x8] sm:$0xff]
    %v176 = vld [vmem:[#allocation2 + $0x10] sm:$0xff]
    %v177 = vld [vmem:[#allocation2 + $0x20] sm:$0xff]
    %v178 = vld [vmem:[#allocation2 + $0x28] sm:$0xff]
    %v179 = vld [vmem:[#allocation2 + $0x30] sm:$0xff]
    %v180 = vld [vmem:[#allocation2 + $0x1] sm:$0xff]
    %v181 = vld [vmem:[#allocation2 + $0x9] sm:$0xff]
    %v182 = vld [vmem:[#allocation2 + $0x11] sm:$0xff]
    %v183 = vld [vmem:[#allocation2 + $0x21] sm:$0xff]
    %v184 = vld [vmem:[#allocation2 + $0x29] sm:$0xff]
    %v185 = vld [vmem:[#allocation2 + $0x31] sm:$0xff]
    %v186 = vld [vmem:[#allocation2 + $0x2] sm:$0xff]
    %v187 = vld [vmem:[#allocation2 + $0xa] sm:$0xff]
    %v188 = vld [vmem:[#allocation2 + $0x12] sm:$0xff]
    %v189 = vld [vmem:[#allocation2 + $0x22] sm:$0xff]
    %v190 = vld [vmem:[#allocation2 + $0x2a] sm:$0xff]
    %v191 = vld [vmem:[#allocation2 + $0x32] sm:$0xff]
    %v192 = vld [vmem:[#allocation2 + $0x3] sm:$0xff]
    %v193 = vld [vmem:[#allocation2 + $0xb] sm:$0xff]
    %v194 = vld [vmem:[#allocation2 + $0x13] sm:$0xff]
    %v195 = vld [vmem:[#allocation2 + $0x23] sm:$0xff]
    %v196 = vld [vmem:[#allocation2 + $0x2b] sm:$0xff]
    %v197 = vld [vmem:[#allocation2 + $0x33] sm:$0xff]
    %v198 = vld [vmem:[#allocation2 + $0x4] sm:$0xff]
    %v199 = vld [vmem:[#allocation2 + $0xc] sm:$0xff]
    %v200 = vld [vmem:[#allocation2 + $0x14] sm:$0xff]
    %v201 = vld [vmem:[#allocation2 + $0x24] sm:$0xff]
    %v202 = vld [vmem:[#allocation2 + $0x2c] sm:$0xff]
    %v203 = vld [vmem:[#allocation2 + $0x34] sm:$0xff]
    %v204 = vld [vmem:[#allocation2 + $0x5] sm:$0xff]
    %v205 = vld [vmem:[#allocation2 + $0xd] sm:$0xff]
    %v206 = vld [vmem:[#allocation2 + $0x15] sm:$0xff]
    %v207 = vld [vmem:[#allocation2 + $0x25] sm:$0xff]
    %v208 = vld [vmem:[#allocation2 + $0x2d] sm:$0xff]
    %v209 = vld [vmem:[#allocation2 + $0x35] sm:$0xff]
    %v210 = vld [vmem:[#allocation2 + $0x6] sm:$0xff]
    %v211 = vld [vmem:[#allocation2 + $0xe] sm:$0xff]
    %v212 = vld [vmem:[#allocation2 + $0x16] sm:$0xff]
    %v213 = vld [vmem:[#allocation2 + $0x26] sm:$0xff]
    %v214 = vld [vmem:[#allocation2 + $0x2e] sm:$0xff]
    %v215 = vld [vmem:[#allocation2 + $0x36] sm:$0xff]
    %v216 = vld [vmem:[#allocation2 + $0x7] sm:$0xff]
    %v217 = vld [vmem:[#allocation2 + $0xf] sm:$0xff]
    %v218 = vld [vmem:[#allocation2 + $0x17] sm:$0xff]
    %v219 = vld [vmem:[#allocation2 + $0x27] sm:$0xff]
    %v220 = vld [vmem:[#allocation2 + $0x2f] sm:$0xff]
    %v221 = vld [vmem:[#allocation2 + $0x37] sm:$0xff]
    %228 = vrot.lane.b32.xlu0 %v180, 32
    %v229 = vpop.permute.xlu0 %228
    %230 = vrot.lane.b32.xlu0 %v181, 32
    %v231 = vpop.permute.xlu0 %230
    %232 = vrot.lane.b32.xlu0 %v182, 32
    %v233 = vpop.permute.xlu0 %232
    %234 = vrot.lane.b32.xlu0 %v183, 32
    %v235 = vpop.permute.xlu0 %234
    %236 = vrot.lane.b32.xlu0 %v184, 32
    %v237 = vpop.permute.xlu0 %236
    %238 = vrot.lane.b32.xlu0 %v185, 32
    %v239 = vpop.permute.xlu0 %238
    %252 = vrot.lane.b32.xlu0 %v186, 64
    %v253 = vpop.permute.xlu0 %252
    %254 = vrot.lane.b32.xlu0 %v187, 64
    %v255 = vpop.permute.xlu0 %254
    %256 = vrot.lane.b32.xlu0 %v188, 64
    %v257 = vpop.permute.xlu0 %256
    %258 = vrot.lane.b32.xlu0 %v189, 64
    %v259 = vpop.permute.xlu0 %258
    %260 = vrot.lane.b32.xlu0 %v190, 64
    %v261 = vpop.permute.xlu0 %260
    %262 = vrot.lane.b32.xlu0 %v191, 64
    %v263 = vpop.permute.xlu0 %262
    %276 = vrot.lane.b32.xlu0 %v192, 96
    %v277 = vpop.permute.xlu0 %276
    %278 = vrot.lane.b32.xlu0 %v193, 96
    %v279 = vpop.permute.xlu0 %278
    %280 = vrot.lane.b32.xlu0 %v194, 96
    %v281 = vpop.permute.xlu0 %280
    %282 = vrot.lane.b32.xlu0 %v195, 96
    %v283 = vpop.permute.xlu0 %282
    %284 = vrot.lane.b32.xlu0 %v196, 96
    %v285 = vpop.permute.xlu0 %284
    %286 = vrot.lane.b32.xlu0 %v197, 96
    %v287 = vpop.permute.xlu0 %286
    %300 = vrot.lane.b32.xlu0 %v204, 32
    %v301 = vpop.permute.xlu0 %300
    %302 = vrot.lane.b32.xlu0 %v205, 32
    %v303 = vpop.permute.xlu0 %302
    %304 = vrot.lane.b32.xlu0 %v206, 32
    %v305 = vpop.permute.xlu0 %304
    %306 = vrot.lane.b32.xlu0 %v207, 32
    %v307 = vpop.permute.xlu0 %306
    %308 = vrot.lane.b32.xlu0 %v208, 32
    %v309 = vpop.permute.xlu0 %308
    %310 = vrot.lane.b32.xlu0 %v209, 32
    %v311 = vpop.permute.xlu0 %310
    %324 = vrot.lane.b32.xlu0 %v210, 64
    %v325 = vpop.permute.xlu0 %324
    %326 = vrot.lane.b32.xlu0 %v211, 64
    %v327 = vpop.permute.xlu0 %326
    %328 = vrot.lane.b32.xlu0 %v212, 64
    %v329 = vpop.permute.xlu0 %328
    %330 = vrot.lane.b32.xlu0 %v213, 64
    %v331 = vpop.permute.xlu0 %330
    %332 = vrot.lane.b32.xlu0 %v214, 64
    %v333 = vpop.permute.xlu0 %332
    %334 = vrot.lane.b32.xlu0 %v215, 64
    %v335 = vpop.permute.xlu0 %334
    %348 = vrot.lane.b32.xlu0 %v216, 96
    %v349 = vpop.permute.xlu0 %348
    %350 = vrot.lane.b32.xlu0 %v217, 96
    %v351 = vpop.permute.xlu0 %350
    %352 = vrot.lane.b32.xlu0 %v218, 96
    %v353 = vpop.permute.xlu0 %352
    %354 = vrot.lane.b32.xlu0 %v219, 96
    %v355 = vpop.permute.xlu0 %354
    %356 = vrot.lane.b32.xlu0 %v220, 96
    %v357 = vpop.permute.xlu0 %356
    %358 = vrot.lane.b32.xlu0 %v221, 96
    %v359 = vpop.permute.xlu0 %358
    %v366 = vsel %vm160, %v174, %v229
    %v367 = vsel %vm160, %v175, %v231
    %v368 = vsel %vm160, %v176, %v233
    %v369 = vsel %vm160, %v177, %v235
    %v370 = vsel %vm160, %v178, %v237
    %v371 = vsel %vm160, %v179, %v239
    %v372 = vsel %vm62, %v366, %v253
    %v373 = vsel %vm62, %v367, %v255
    %v374 = vsel %vm62, %v368, %v257
    %v375 = vsel %vm62, %v369, %v259
    %v376 = vsel %vm62, %v370, %v261
    %v377 = vsel %vm62, %v371, %v263
    %vm378 = vcmask 785408
    %v379 = vsel %vm378, %v372, %v277
    %v380 = vsel %vm378, %v373, %v279
    %v381 = vsel %vm378, %v374, %v281
    %v382 = vsel %vm378, %v375, %v283
    %v383 = vsel %vm378, %v376, %v285
    %v384 = vsel %vm378, %v377, %v287
    %v385 = vsel %vm160, %v198, %v301
    %v386 = vsel %vm160, %v199, %v303
    %v387 = vsel %vm160, %v200, %v305
    %v388 = vsel %vm160, %v201, %v307
    %v389 = vsel %vm160, %v202, %v309
    %v390 = vsel %vm160, %v203, %v311
    %v391 = vsel %vm62, %v385, %v325
    %v392 = vsel %vm62, %v386, %v327
    %v393 = vsel %vm62, %v387, %v329
    %v394 = vsel %vm62, %v388, %v331
    %v395 = vsel %vm62, %v389, %v333
    %v396 = vsel %vm62, %v390, %v335
    %v397 = vsel %vm378, %v391, %v349
    %v398 = vsel %vm378, %v392, %v351
    %v399 = vsel %vm378, %v393, %v353
    %v400 = vsel %vm378, %v394, %v355
    %v401 = vsel %vm378, %v395, %v357
    %v402 = vsel %vm378, %v396, %v359
    %v403 = vld [vmem:[%s2] sm:$0xff]
    %v404 = vld [vmem:[%s2 + $0x8] sm:$0xff]
    %v405 = vld [vmem:[%s2 + $0x10] sm:$0xff]
    %v406 = vld [vmem:[%s2 + $0x18] sm:$0xff]
    %v407 = vld [vmem:[%s2 + $0x20] sm:$0xff]
    %v408 = vld [vmem:[%s2 + $0x28] sm:$0xff]
    %v409 = vld [vmem:[%s2 + $0x30] sm:$0xff]
    %v410 = vld [vmem:[%s2 + $0x38] sm:$0xff]
    %v411 = vld [vmem:[%s2 + $0x40] sm:$0xff]
    %v412 = vld [vmem:[%s2 + $0x48] sm:$0xff]
    %v413 = vld [vmem:[%s2 + $0x50] sm:$0xff]
    %v414 = vld [vmem:[%s2 + $0x58] sm:$0xff]
    %v415 = vld [vmem:[%s2 + $0x60] sm:$0xff]
    %v416 = vld [vmem:[%s2 + $0x68] sm:$0xff]
    %v417 = vld [vmem:[%s2 + $0x70] sm:$0xff]
    %v418 = vld [vmem:[%s2 + $0x78] sm:$0xff]
    %v419 = vld [vmem:[%s2 + $0x80] sm:$0xff]
    %v420 = vld [vmem:[%s2 + $0x88] sm:$0xff]
    %v421 = vld [vmem:[%s2 + $0x90] sm:$0xff]
    %v422 = vld [vmem:[%s2 + $0x98] sm:$0xff]
    %v423 = vld [vmem:[%s2 + $0xa0] sm:$0xff]
    %v424 = vld [vmem:[%s2 + $0xa8] sm:$0xff]
    %v425 = vld [vmem:[%s2 + $0xb0] sm:$0xff]
    %v426 = vld [vmem:[%s2 + $0xb8] sm:$0xff]
    %v427 = vld [vmem:[%s2 + $0xc0] sm:$0xff]
    %v428 = vld [vmem:[%s2 + $0xc8] sm:$0xff]
    %v429 = vld [vmem:[%s2 + $0xd0] sm:$0xff]
    %v430 = vld [vmem:[%s2 + $0xd8] sm:$0xff]
    %v431 = vld [vmem:[%s2 + $0xe0] sm:$0xff]
    %v432 = vld [vmem:[%s2 + $0xe8] sm:$0xff]
    %v433 = vld [vmem:[%s2 + $0xf0] sm:$0xff]
    %v434 = vld [vmem:[%s2 + $0xf8] sm:$0xff]
    %v435 = vld [vmem:[%s3] sm:$0x1]
    %v437 = vlaneseq
    %v438 = vshrl.u32 %v437, 7
    %v439 = vsub.s32 0, %v438
    %v440 = vrot.slane %v435, %v439
    %442 = vmatprep.subr.mxu0 0.0
    %443 = vmatpush1.msra.mxu0 %v418
    %444 = vmatprep.subr.mxu0 0.0
    %445 = vmatpush1.msra.mxu0 %v417
    %446 = vmatprep.subr.mxu0 0.0
    %447 = vmatpush1.msra.mxu0 %v416
    %448 = vmatprep.subr.mxu0 0.0
    %449 = vmatpush1.msra.mxu0 %v415
    %450 = vmatprep.subr.mxu0 0.0
    %451 = vmatpush1.msra.mxu0 %v414
    %452 = vmatprep.subr.mxu0 0.0
    %453 = vmatpush1.msra.mxu0 %v413
    %454 = vmatprep.subr.mxu0 0.0
    %455 = vmatpush1.msra.mxu0 %v412
    %456 = vmatprep.subr.mxu0 0.0
    %457 = vmatpush1.msra.mxu0 %v411
    %458 = vmatprep.subr.mxu0 0.0
    %459 = vmatpush1.msra.mxu0 %v410
    %460 = vmatprep.subr.mxu0 0.0
    %461 = vmatpush1.msra.mxu0 %v409
    %462 = vmatprep.subr.mxu0 0.0
    %463 = vmatpush1.msra.mxu0 %v408
    %464 = vmatprep.subr.mxu0 0.0
    %465 = vmatpush1.msra.mxu0 %v407
    %466 = vmatprep.subr.mxu0 0.0
    %467 = vmatpush1.msra.mxu0 %v406
    %468 = vmatprep.subr.mxu0 0.0
    %469 = vmatpush1.msra.mxu0 %v405
    %470 = vmatprep.subr.mxu0 0.0
    %471 = vmatpush1.msra.mxu0 %v404
    %472 = vmatprep.subr.mxu0 0.0
    %473 = vmatpush1.msra.mxu0 %v403
    %474 = vmatprep.subr.mxu0 0.0
    %475 = vmatpush2.msra.mxu0 %v434
    %476 = vmatprep.subr.mxu0 0.0
    %477 = vmatpush2.msra.mxu0 %v433
    %478 = vmatprep.subr.mxu0 0.0
    %479 = vmatpush2.msra.mxu0 %v432
    %480 = vmatprep.subr.mxu0 0.0
    %481 = vmatpush2.msra.mxu0 %v431
    %482 = vmatprep.subr.mxu0 0.0
    %483 = vmatpush2.msra.mxu0 %v430
    %484 = vmatprep.subr.mxu0 0.0
    %485 = vmatpush2.msra.mxu0 %v429
    %486 = vmatprep.subr.mxu0 0.0
    %487 = vmatpush2.msra.mxu0 %v428
    %488 = vmatprep.subr.mxu0 0.0
    %489 = vmatpush2.msra.mxu0 %v427
    %490 = vmatprep.subr.mxu0 0.0
    %491 = vmatpush2.msra.mxu0 %v426
    %492 = vmatprep.subr.mxu0 0.0
    %493 = vmatpush2.msra.mxu0 %v425
    %494 = vmatprep.subr.mxu0 0.0
    %495 = vmatpush2.msra.mxu0 %v424
    %496 = vmatprep.subr.mxu0 0.0
    %497 = vmatpush2.msra.mxu0 %v423
    %498 = vmatprep.subr.mxu0 0.0
    %499 = vmatpush2.msra.mxu0 %v422
    %500 = vmatprep.subr.mxu0 0.0
    %501 = vmatpush2.msra.mxu0 %v421
    %502 = vmatprep.subr.mxu0 0.0
    %503 = vmatpush2.msra.mxu0 %v420
    %504 = vmatprep.subr.mxu0 0.0
    %505 = vmatpush2.msra.mxu0 %v419
    %506 = vmatprep.mubr.f32.mxu0 %v397
    %507 = vmatmul.mubr.f32.gmra.mxu0 %v379
    %v508 = vpop.f32.mrf.mxu0
    %v509 = vadd.f32 %v440, %v508
    %v510 = vpop.f32.mrf.mxu0
    %511 = vmatprep.mubr.f32.mxu0 %v398
    %512 = vmatmul.mubr.f32.gmra.mxu0 %v380
    %v513 = vpop.f32.mrf.mxu0
    %v514 = vadd.f32 %v440, %v513
    %v515 = vpop.f32.mrf.mxu0
    %516 = vmatprep.mubr.f32.mxu0 %v399
    %517 = vmatmul.mubr.f32.gmra.mxu0 %v381
    %v518 = vpop.f32.mrf.mxu0
    %v519 = vadd.f32 %v440, %v518
    %v520 = vpop.f32.mrf.mxu0
    %521 = vmatprep.mubr.f32.mxu0 %v400
    %522 = vmatmul.mubr.f32.gmra.mxu0 %v382
    %v523 = vpop.f32.mrf.mxu0
    %v524 = vadd.f32 %v440, %v523
    %v525 = vpop.f32.mrf.mxu0
    %526 = vmatprep.mubr.f32.mxu0 %v401
    %527 = vmatmul.mubr.f32.gmra.mxu0 %v383
    %v528 = vpop.f32.mrf.mxu0
    %v529 = vadd.f32 %v440, %v528
    %v530 = vpop.f32.mrf.mxu0
    %531 = vmatprep.mubr.f32.mxu0 %v402
    %532 = vmatmul.mubr.f32.gmra.mxu0 %v384
    %v533 = vpop.f32.mrf.mxu0
    %v534 = vadd.f32 %v440, %v533
    %v535 = vpop.f32.mrf.mxu0
    %536 = vdwg.mxu0
    %v537 = vmax.f32 %v509, 0.0
    %v538 = vmax.f32 %v514, 0.0
    %v539 = vmax.f32 %v519, 0.0
    %v540 = vmax.f32 %v524, 0.0
    %v541 = vmax.f32 %v529, 0.0
    %v542 = vmax.f32 %v534, 0.0
    %vm543 = vcmask 61440
    %v544 = vsel %vm543, %v537, -inf
    %v545 = vrot.slane %v544, 4
    %v546 = vmax.f32 %v544, %v545
    %v547 = vrot.slane %v546, 2
    %v548 = vmax.f32 %v546, %v547
    %v549 = vrot.slane %v548, 1
    %v550 = vmax.f32 %v548, %v549
    %v551 = vsel %vm543, %v540, -inf
    %v552 = vrot.slane %v551, 4
    %v553 = vmax.f32 %v551, %v552
    %v554 = vrot.slane %v553, 2
    %v555 = vmax.f32 %v553, %v554
    %v556 = vrot.slane %v555, 1
    %v557 = vmax.f32 %v555, %v556
    %vm558 = vcmask 64516
    %v559 = vsel %vm558, %v537, -inf
    %vm560 = vcmask 57344
    %v561 = vsel %vm560, %v538, -inf
    %v562 = vmax.f32 %v559, %v561
    %v563 = vrot.slane %v562, 4
    %v564 = vmax.f32 %v562, %v563
    %v565 = vrot.slane %v564, 2
    %v566 = vmax.f32 %v564, %v565
    %v567 = vrot.slane %v566, 1
    %v568 = vmax.f32 %v566, %v567
    %v569 = vsel %vm558, %v540, -inf
    %v570 = vsel %vm560, %v541, -inf
    %v571 = vmax.f32 %v569, %v570
    %v572 = vrot.slane %v571, 4
    %v573 = vmax.f32 %v571, %v572
    %v574 = vrot.slane %v573, 2
    %v575 = vmax.f32 %v573, %v574
    %v576 = vrot.slane %v575, 1
    %v577 = vmax.f32 %v575, %v576
    %v578 = vsel %vm543, %v538, -inf
    %v579 = vrot.slane %v578, 4
    %v580 = vmax.f32 %v578, %v579
    %v581 = vrot.slane %v580, 2
    %v582 = vmax.f32 %v580, %v581
    %v583 = vrot.slane %v582, 1
    %v584 = vmax.f32 %v582, %v583
    %v585 = vsel %vm543, %v541, -inf
    %v586 = vrot.slane %v585, 4
    %v587 = vmax.f32 %v585, %v586
    %v588 = vrot.slane %v587, 2
    %v589 = vmax.f32 %v587, %v588
    %v590 = vrot.slane %v589, 1
    %v591 = vmax.f32 %v589, %v590
    %v592 = vsel %vm558, %v538, -inf
    %v593 = vsel %vm560, %v539, -inf
    %v594 = vmax.f32 %v592, %v593
    %v595 = vrot.slane %v594, 4
    %v596 = vmax.f32 %v594, %v595
    %v597 = vrot.slane %v596, 2
    %v598 = vmax.f32 %v596, %v597
    %v599 = vrot.slane %v598, 1
    %v600 = vmax.f32 %v598, %v599
    %v601 = vsel %vm558, %v541, -inf
    %v602 = vsel %vm560, %v542, -inf
    %v603 = vmax.f32 %v601, %v602
    %v604 = vrot.slane %v603, 4
    %v605 = vmax.f32 %v603, %v604
    %v606 = vrot.slane %v605, 2
    %v607 = vmax.f32 %v605, %v606
    %v608 = vrot.slane %v607, 1
    %v609 = vmax.f32 %v607, %v608
    %vm610 = vcmask 127040
    %v611 = vsel %vm610, %v537, -inf
    %v612 = vrot.slane %v611, 4
    %v613 = vmax.f32 %v611, %v612
    %v614 = vrot.slane %v613, 2
    %v615 = vmax.f32 %v613, %v614
    %v616 = vrot.slane %v615, 1
    %v617 = vmax.f32 %v615, %v616
    %v618 = vsel %vm610, %v540, -inf
    %v619 = vrot.slane %v618, 4
    %v620 = vmax.f32 %v618, %v619
    %v621 = vrot.slane %v620, 2
    %v622 = vmax.f32 %v620, %v621
    %v623 = vrot.slane %v622, 1
    %v624 = vmax.f32 %v622, %v623
    %vm625 = vcmask 130116
    %v626 = vsel %vm625, %v537, -inf
    %vm627 = vcmask 123968
    %v628 = vsel %vm627, %v538, -inf
    %v629 = vmax.f32 %v626, %v628
    %v630 = vrot.slane %v629, 4
    %v631 = vmax.f32 %v629, %v630
    %v632 = vrot.slane %v631, 2
    %v633 = vmax.f32 %v631, %v632
    %v634 = vrot.slane %v633, 1
    %v635 = vmax.f32 %v633, %v634
    %v636 = vsel %vm625, %v540, -inf
    %v637 = vsel %vm627, %v541, -inf
    %v638 = vmax.f32 %v636, %v637
    %v639 = vrot.slane %v638, 4
    %v640 = vmax.f32 %v638, %v639
    %v641 = vrot.slane %v640, 2
    %v642 = vmax.f32 %v640, %v641
    %v643 = vrot.slane %v642, 1
    %v644 = vmax.f32 %v642, %v643
    %vm645 = vcmask 129089
    %v646 = vsel %vm645, %v538, -inf
    %v647 = vrot.slane %v646, 4
    %v648 = vmax.f32 %v646, %v647
    %v649 = vrot.slane %v648, 2
    %v650 = vmax.f32 %v648, %v649
    %v651 = vrot.slane %v650, 1
    %v652 = vmax.f32 %v650, %v651
    %v653 = vsel %vm645, %v541, -inf
    %v654 = vrot.slane %v653, 4
    %v655 = vmax.f32 %v653, %v654
    %v656 = vrot.slane %v655, 2
    %v657 = vmax.f32 %v655, %v656
    %v658 = vrot.slane %v657, 1
    %v659 = vmax.f32 %v657, %v658
    %vm660 = vcmask 130118
    %v661 = vsel %vm660, %v538, -inf
    %vm662 = vcmask 124992
    %v663 = vsel %vm662, %v539, -inf
    %v664 = vmax.f32 %v661, %v663
    %v665 = vrot.slane %v664, 4
    %v666 = vmax.f32 %v664, %v665
    %v667 = vrot.slane %v666, 2
    %v668 = vmax.f32 %v666, %v667
    %v669 = vrot.slane %v668, 1
    %v670 = vmax.f32 %v668, %v669
    %v671 = vsel %vm660, %v541, -inf
    %v672 = vsel %vm662, %v542, -inf
    %v673 = vmax.f32 %v671, %v672
    %v674 = vrot.slane %v673, 4
    %v675 = vmax.f32 %v673, %v674
    %v676 = vrot.slane %v675, 2
    %v677 = vmax.f32 %v675, %v676
    %v678 = vrot.slane %v677, 1
    %v679 = vmax.f32 %v677, %v678
    %vm680 = vcmask 193664
    %v681 = vsel %vm680, %v537, -inf
    %v682 = vrot.slane %v681, 4
    %v683 = vmax.f32 %v681, %v682
    %v684 = vrot.slane %v683, 2
    %v685 = vmax.f32 %v683, %v684
    %v686 = vrot.slane %v685, 1
    %v687 = vmax.f32 %v685, %v686
    %v688 = vsel %vm680, %v540, -inf
    %v689 = vrot.slane %v688, 4
    %v690 = vmax.f32 %v688, %v689
    %v691 = vrot.slane %v690, 2
    %v692 = vmax.f32 %v690, %v691
    %v693 = vrot.slane %v692, 1
    %v694 = vmax.f32 %v692, %v693
    %vm695 = vcmask 195717
    %v696 = vsel %vm695, %v537, -inf
    %vm697 = vcmask 191616
    %v698 = vsel %vm697, %v538, -inf
    %v699 = vmax.f32 %v696, %v698
    %v700 = vrot.slane %v699, 4
    %v701 = vmax.f32 %v699, %v700
    %v702 = vrot.slane %v701, 2
    %v703 = vmax.f32 %v701, %v702
    %v704 = vrot.slane %v703, 1
    %v705 = vmax.f32 %v703, %v704
    %v706 = vsel %vm695, %v540, -inf
    %v707 = vsel %vm697, %v541, -inf
    %v708 = vmax.f32 %v706, %v707
    %v709 = vrot.slane %v708, 4
    %v710 = vmax.f32 %v708, %v709
    %v711 = vrot.slane %v710, 2
    %v712 = vmax.f32 %v710, %v711
    %v713 = vrot.slane %v712, 1
    %v714 = vmax.f32 %v712, %v713
    %vm715 = vcmask 195715
    %v716 = vsel %vm715, %v538, -inf
    %vm717 = vcmask 189568
    %v718 = vsel %vm717, %v539, -inf
    %v719 = vmax.f32 %v716, %v718
    %v720 = vrot.slane %v719, 4
    %v721 = vmax.f32 %v719, %v720
    %v722 = vrot.slane %v721, 2
    %v723 = vmax.f32 %v721, %v722
    %v724 = vrot.slane %v723, 1
    %v725 = vmax.f32 %v723, %v724
    %v726 = vsel %vm715, %v541, -inf
    %v727 = vsel %vm717, %v542, -inf
    %v728 = vmax.f32 %v726, %v727
    %v729 = vrot.slane %v728, 4
    %v730 = vmax.f32 %v728, %v729
    %v731 = vrot.slane %v730, 2
    %v732 = vmax.f32 %v730, %v731
    %v733 = vrot.slane %v732, 1
    %v734 = vmax.f32 %v732, %v733
    %vm735 = vcmask 194689
    %v736 = vsel %vm735, %v539, -inf
    %v737 = vrot.slane %v736, 4
    %v738 = vmax.f32 %v736, %v737
    %v739 = vrot.slane %v738, 2
    %v740 = vmax.f32 %v738, %v739
    %v741 = vrot.slane %v740, 1
    %v742 = vmax.f32 %v740, %v741
    %v743 = vsel %vm735, %v542, -inf
    %v744 = vrot.slane %v743, 4
    %v745 = vmax.f32 %v743, %v744
    %v746 = vrot.slane %v745, 2
    %v747 = vmax.f32 %v745, %v746
    %v748 = vrot.slane %v747, 1
    %v749 = vmax.f32 %v747, %v748
    %vm752 = vcmask 1041409
    %v753 = vsel %vm752, %v557, %v550
    %v757 = vsel %vm752, %v577, %v568
    %758 = vrot.lane.b32.xlu0 %v757, 8
    %v759 = vpop.permute.xlu0 %758
    %v763 = vsel %vm752, %v591, %v584
    %764 = vrot.lane.b32.xlu0 %v763, 16
    %v765 = vpop.permute.xlu0 %764
    %v769 = vsel %vm752, %v609, %v600
    %770 = vrot.lane.b32.xlu0 %v769, 24
    %v771 = vpop.permute.xlu0 %770
    %v775 = vsel %vm752, %v624, %v617
    %776 = vrot.lane.b32.xlu0 %v775, 24
    %v777 = vpop.permute.xlu0 %776
    %v781 = vsel %vm752, %v644, %v635
    %782 = vrot.lane.b32.xlu0 %v781, 32
    %v783 = vpop.permute.xlu0 %782
    %v787 = vsel %vm752, %v659, %v652
    %788 = vrot.lane.b32.xlu0 %v787, 40
    %v789 = vpop.permute.xlu0 %788
    %v793 = vsel %vm752, %v679, %v670
    %794 = vrot.lane.b32.xlu0 %v793, 48
    %v795 = vpop.permute.xlu0 %794
    %v799 = vsel %vm752, %v694, %v687
    %800 = vrot.lane.b32.xlu0 %v799, 48
    %v801 = vpop.permute.xlu0 %800
    %v805 = vsel %vm752, %v714, %v705
    %806 = vrot.lane.b32.xlu0 %v805, 56
    %v807 = vpop.permute.xlu0 %806
    %v811 = vsel %vm752, %v734, %v725
    %812 = vrot.lane.b32.xlu0 %v811, 64
    %v813 = vpop.permute.xlu0 %812
    %v817 = vsel %vm752, %v749, %v742
    %818 = vrot.lane.b32.xlu0 %v817, 72
    %v819 = vpop.permute.xlu0 %818
    %vm821 = vcmask 64512
    %v822 = vsel %vm821, %v753, %v759
    %vm823 = vcmask 130048
    %v824 = vsel %vm823, %v822, %v765
    %vm825 = vcmask 195584
    %v826 = vsel %vm825, %v824, %v771
    %v827 = vsel %vm160, %v826, %v777
    %vm828 = vcmask 326656
    %v829 = vsel %vm828, %v827, %v783
    %vm830 = vcmask 392192
    %v831 = vsel %vm830, %v829, %v789
    %vm832 = vcmask 457728
    %v833 = vsel %vm832, %v831, %v795
    %v834 = vsel %vm62, %v833, %v801
    %vm835 = vcmask 588800
    %v836 = vsel %vm835, %v834, %v807
    %vm837 = vcmask 654336
    %v838 = vsel %vm837, %v836, %v813
    %vm839 = vcmask 719872
    %v840 = vsel %vm839, %v838, %v819
    %v841 = vld [vmem:[%s4] sm:$0xff]
    %v842 = vld [vmem:[%s4 + $0x8] sm:$0xff]
    %v843 = vld [vmem:[%s4 + $0x10] sm:$0xff]
    %v844 = vld [vmem:[%s4 + $0x18] sm:$0xff]
    %v845 = vld [vmem:[%s4 + $0x20] sm:$0xff]
    %v846 = vld [vmem:[%s4 + $0x28] sm:$0xff]
    %v847 = vld [vmem:[%s4 + $0x30] sm:$0xff]
    %v848 = vld [vmem:[%s4 + $0x38] sm:$0xff]
    %v849 = vld [vmem:[%s4 + $0x40] sm:$0xff]
    %v850 = vld [vmem:[%s4 + $0x48] sm:$0xff]
    %v851 = vld [vmem:[%s4 + $0x50] sm:$0xff]
    %v852 = vld [vmem:[%s4 + $0x58] sm:$0xff]
    %v853 = vld [vmem:[%s5] sm:$0x1]
    %v855 = vlaneseq
    %v856 = vshrl.u32 %v855, 7
    %v857 = vsub.s32 0, %v856
    %v858 = vrot.slane %v853, %v857
    %v861 = vsel %vm378, %v840, 0
    %863 = vmatprep.subr.mxu0 0.0
    %864 = vmatpush1.msra.mxu0 0.0
    %865 = vmatprep.subr.mxu0 0.0
    %866 = vmatpush1.msra.mxu0 0.0
    %867 = vmatprep.subr.mxu0 0.0
    %868 = vmatpush1.msra.mxu0 0.0
    %869 = vmatprep.subr.mxu0 0.0
    %870 = vmatpush1.msra.mxu0 0.0
    %871 = vmatprep.subr.mxu0 0.0
    %872 = vmatpush1.msra.mxu0 %v852
    %873 = vmatprep.subr.mxu0 0.0
    %874 = vmatpush1.msra.mxu0 %v851
    %875 = vmatprep.subr.mxu0 0.0
    %876 = vmatpush1.msra.mxu0 %v850
    %877 = vmatprep.subr.mxu0 0.0
    %878 = vmatpush1.msra.mxu0 %v849
    %879 = vmatprep.subr.mxu0 0.0
    %880 = vmatpush1.msra.mxu0 %v848
    %881 = vmatprep.subr.mxu0 0.0
    %882 = vmatpush1.msra.mxu0 %v847
    %883 = vmatprep.subr.mxu0 0.0
    %884 = vmatpush1.msra.mxu0 %v846
    %885 = vmatprep.subr.mxu0 0.0
    %886 = vmatpush1.msra.mxu0 %v845
    %887 = vmatprep.subr.mxu0 0.0
    %888 = vmatpush1.msra.mxu0 %v844
    %889 = vmatprep.subr.mxu0 0.0
    %890 = vmatpush1.msra.mxu0 %v843
    %891 = vmatprep.subr.mxu0 0.0
    %892 = vmatpush1.msra.mxu0 %v842
    %893 = vmatprep.subr.mxu0 0.0
    %894 = vmatpush1.msra.mxu0 %v841
    %895 = vmatprep.subr.mxu0 0.0
    %896 = vmatpush2.msra.mxu0 0.0
    %897 = vmatprep.subr.mxu0 0.0
    %898 = vmatpush2.msra.mxu0 0.0
    %899 = vmatprep.subr.mxu0 0.0
    %900 = vmatpush2.msra.mxu0 0.0
    %901 = vmatprep.subr.mxu0 0.0
    %902 = vmatpush2.msra.mxu0 0.0
    %903 = vmatprep.subr.mxu0 0.0
    %904 = vmatpush2.msra.mxu0 0.0
    %905 = vmatprep.subr.mxu0 0.0
    %906 = vmatpush2.msra.mxu0 0.0
    %907 = vmatprep.subr.mxu0 0.0
    %908 = vmatpush2.msra.mxu0 0.0
    %909 = vmatprep.subr.mxu0 0.0
    %910 = vmatpush2.msra.mxu0 0.0
    %911 = vmatprep.subr.mxu0 0.0
    %912 = vmatpush2.msra.mxu0 0.0
    %913 = vmatprep.subr.mxu0 0.0
    %914 = vmatpush2.msra.mxu0 0.0
    %915 = vmatprep.subr.mxu0 0.0
    %916 = vmatpush2.msra.mxu0 0.0
    %917 = vmatprep.subr.mxu0 0.0
    %918 = vmatpush2.msra.mxu0 0.0
    %919 = vmatprep.subr.mxu0 0.0
    %920 = vmatpush2.msra.mxu0 0.0
    %921 = vmatprep.subr.mxu0 0.0
    %922 = vmatpush2.msra.mxu0 0.0
    %923 = vmatprep.subr.mxu0 0.0
    %924 = vmatpush2.msra.mxu0 0.0
    %925 = vmatprep.subr.mxu0 0.0
    %926 = vmatpush2.msra.mxu0 0.0
    %927 = vmatprep.mubr.f32.mxu0 0.0
    %928 = vmatmul.mubr.f32.gmra.mxu0 %v861
    %v929 = vpop.f32.mrf.mxu0
    %v930 = vadd.f32 %v858, %v929
    %v931 = vpop.f32.mrf.mxu0
    %932 = vdwg.mxu0
    %v933 = vmax.f32 %v930, 0.0
    %vm934 = vcmask 254976
    %935 = vst.msk [vmem:[#allocation3] sm:$0x3] %vm934, %v933
    // Predicated region
    $region26: #{xmlcnn_encoder.1} parent=1 // pred_check
      _
    $region27: #{xmlcnn_encoder.1} parent=1 // pred_check_branch
      %937 = sbr.rel (0) target = $region29
    $region28: #{xmlcnn_encoder.1} parent=1 // pred_region
      %s939 = ssub.s32 32, 32
      %940 = vsyncadd [#allocation4], %s939
      %s942 = sshll.u32 [#allocation3], 4
      %s943 = int_to_ptr.vmem [resolvable:$true] %s942
      %945 = dma.vmem_to_hbm [thread:$0]  %s943, 32, %s6, [#allocation4]
    $region29: #{xmlcnn_encoder.1} parent=1 // pred_fallthru
      _
    // Predicated region
    $region30: #{xmlcnn_encoder.1} parent=1 // pred_check
      _
    $region31: #{xmlcnn_encoder.1} parent=1 // pred_check_branch
      %947 = sbr.rel (0) target = $region33
    $region32: #{xmlcnn_encoder.1} parent=1 // pred_region
      %948 = dma.done [#allocation4], 32
    $region33: #{xmlcnn_encoder.1} parent=1 // pred_fallthru
      _
    %949 = vsyncpa [#allocation4], 1

</llo_original>
